<compile_context>
chip_gen: v7x
topology: tpu7x:2x2x1
jax: 0.10.0
libtpu: 0.0.40
codegen_flags: <defaults>
</compile_context>

<pallas_src>
import jax
import jax.numpy as jnp
from jax.experimental import pallas as pl
from jax.experimental.pallas import tpu as pltpu

_SUBLANE = 8  # f32 sublane multiple


def _round_up(v, m):
    return (v + m - 1) // m * m


# ------------------------------ fused TCN kernel ------------------------------

def _make_fused_kernel(meta, head, K, N, L, c_in, c_in_pad):
    """meta: per-block dict of static ints (co, has_down, dilation, slab locations).
    head: slab locations for the linear head.  Kernel args:
    (x_ref, param_slab_ref, out_ref, xin_scratch)."""
    NL = N * L

    def kernel(x_ref, p_ref, out_ref, xin_ref):
        # ---- stage input (N, C_in, L) -> (C_in_pad, N*L), batch-major lanes (once) ----
        if c_in_pad > c_in:
            xin_ref[c_in:c_in_pad, :] = jnp.zeros((c_in_pad - c_in, NL), jnp.float32)
        for n in range(N):
            xin_ref[0:c_in, n * L:(n + 1) * L] = x_ref[n]
        h = xin_ref[...]                                   # (c_in_pad, NL)

        # Hoisted within-segment lane position, used to mask rolled taps.
        col_mod = jax.lax.broadcasted_iota(jnp.int32, (1, NL), 1) % L

        def load(loc):
            off, r, c = loc
            return p_ref[off:off + r, 0:c]

        def tap_stack(x, d):
            # K causally shifted copies of x built in registers (roll + mask) and
            # stacked along sublanes -> (K*ci, NL); fed straight to the MXU.
            pieces = []
            for k in range(K):
                s = (K - 1 - k) * d                        # causal left shift of tap k
                if s == 0:
                    pieces.append(x)
                elif s >= L:                               # receptive field > sequence
                    pieces.append(jnp.zeros_like(x))
                else:
                    shifted = pltpu.roll(x, shift=s, axis=1)
                    pieces.append(jnp.where(col_mod >= s, shifted, 0.0))
            return jnp.concatenate(pieces, axis=0)

        for m in meta:
            co, d = m["co"], m["dilation"]
            x_in = h
            # conv1 (+ fused 1x1 downsample rows) in one MXU matmul.
            y = jnp.dot(load(m["w1"]), tap_stack(x_in, d),
                        preferred_element_type=jnp.float32) + load(m["b1"])
            h1 = jnp.maximum(y[0:co, :], 0.0)
            res = y[co:2 * co, :] if m["has_down"] else x_in
            # TODO(synk): nn.Dropout is identity in eval mode; training-mode dropout not implemented.
            h2 = jnp.maximum(
                jnp.dot(load(m["w2"]), tap_stack(h1, d),
                        preferred_element_type=jnp.float32) + load(m["b2"]), 0.0)
            h = jnp.maximum(h2 + res, 0.0)                 # (co, NL)

        # ---- head: last timestep per sequence via in-kernel one-hot selector matmul ----
        rown = jax.lax.broadcasted_iota(jnp.int32, (N, NL), 0)
        colj = jax.lax.broadcasted_iota(jnp.int32, (N, NL), 1)
        sel = (colj == rown * L + (L - 1)).astype(jnp.float32)        # (N, NL)
        last = jax.lax.dot_general(sel, h, (((1,), (1,)), ((), ())),
                                   preferred_element_type=jnp.float32)  # (N, C_last)
        logits = jnp.dot(last, load(head["whT"]),
                         preferred_element_type=jnp.float32) + load(head["bh"])  # (N, M)
        mx = jnp.max(logits, axis=1, keepdims=True)
        z = logits - mx
        lse = jnp.log(jnp.sum(jnp.exp(z), axis=1, keepdims=True))
        out_ref[...] = (z - lse).astype(out_ref.dtype)                 # (N, M) directly

    return kernel


def tcn_forward(x, kparams, kernel_size):
    """x: (N, C_in, L) float32.  Returns log_softmax logits (N, num_classes)."""
    N, c_in, L = x.shape
    cp = kparams["c_in_pad"]
    M = kparams["num_classes"]
    kernel = _make_fused_kernel(kparams["meta"], kparams["head"], kernel_size,
                                N, L, c_in, cp)
    return pl.pallas_call(
        kernel,
        out_shape=jax.ShapeDtypeStruct((N, M), x.dtype),
        scratch_shapes=[pltpu.VMEM((cp, N * L), jnp.float32)],  # input staging only
    )(x, kparams["slab"])


# ------------------------------- parameter setup -------------------------------

def _weight_norm_init(v):
    # torch weight_norm with g initialized to ||V|| gives an effective weight == V.
    return v


def init_params(key, input_size, channels, kernel_size, num_materials):
    """PyTorch-layout parameters: conv weights (Co, Ci, K), biases (Co,)."""
    keys = jax.random.split(key, 6 * len(channels) + 2)
    ki = iter(range(len(keys)))
    blocks = []
    ci = input_size
    for co in channels:
        v1 = 0.1 * jax.random.normal(keys[next(ki)], (co, ci, kernel_size), jnp.float32)
        b1 = 0.1 * jax.random.normal(keys[next(ki)], (co,), jnp.float32)
        v2 = 0.1 * jax.random.normal(keys[next(ki)], (co, co, kernel_size), jnp.float32)
        b2 = 0.1 * jax.random.normal(keys[next(ki)], (co,), jnp.float32)
        blk = {"w1": _weight_norm_init(v1), "b1": b1,
               "w2": _weight_norm_init(v2), "b2": b2}
        if ci != co:   # downsample 1x1 conv, as in TemporalBlock
            blk["wd"] = 0.1 * jax.random.normal(keys[next(ki)], (co, ci), jnp.float32)
            blk["bd"] = 0.1 * jax.random.normal(keys[next(ki)], (co,), jnp.float32)
        else:
            next(ki); next(ki)
        blocks.append(blk)
        ci = co
    lin_w = 0.01 * jax.random.normal(keys[next(ki)], (num_materials, channels[-1]), jnp.float32)
    lin_b = 0.1 * jax.random.normal(keys[next(ki)], (num_materials,), jnp.float32)
    return {"blocks": blocks, "lin_w": lin_w, "lin_b": lin_b}


def prepare_kernel_params(params, input_size, channels, kernel_size):
    """One-time glue: stack conv taps, fuse the 1x1 downsample into conv1, and pack
    every parameter into a single (rows, 128) f32 slab (one DMA)."""
    K = kernel_size

    def stack_taps(w, cin, cin_p):
        # (Co, Ci, K) -> (Co, K*Ci_p); tap-major columns matching the kernel's tap stack.
        co = w.shape[0]
        w = jnp.pad(w, ((0, 0), (0, cin_p - cin), (0, 0)))
        return jnp.transpose(w, (0, 2, 1)).reshape(co, K * cin_p)

    raw = []                 # (holder-dict, key, array) in slab order
    meta, head = [], {}
    ci = input_size
    for i, (blk, co) in enumerate(zip(params["blocks"], channels)):
        ci_p = _round_up(ci, _SUBLANE)
        w1 = stack_taps(blk["w1"], ci, ci_p)
        b1 = blk["b1"].reshape(co, 1)
        has_down = "wd" in blk
        if has_down:
            # Fuse the 1x1 downsample into conv1: place wd at the s=0 tap columns.
            wd = jnp.zeros((co, K * ci_p), jnp.float32)
            wd = wd.at[:, (K - 1) * ci_p:(K - 1) * ci_p + ci].set(blk["wd"])
            w1 = jnp.concatenate([w1, wd], axis=0)                       # (2co, K*ci_p)
            b1 = jnp.concatenate([b1, blk["bd"].reshape(co, 1)], axis=0)  # (2co, 1)
        entry = {"co": co, "has_down": has_down, "dilation": 2 ** i}
        for name, arr in (("w1", w1), ("b1", b1),
                          ("w2", stack_taps(blk["w2"], co, co)),
                          ("b2", blk["b2"].reshape(co, 1))):
            raw.append((entry, name, arr))
        meta.append(entry)
        ci = co
    raw.append((head, "whT", params["lin_w"].T))             # (C_last, M)
    raw.append((head, "bh", params["lin_b"].reshape(1, -1)))  # (1, M)

    width = max(128, _round_up(max(a.shape[1] for _, _, a in raw), 128))
    pieces, off = [], 0
    for holder, name, a in raw:
        a = jnp.asarray(a, jnp.float32)
        r, c = a.shape
        holder[name] = (off, r, c)                 # static slab location
        rp = _round_up(r, _SUBLANE)
        pieces.append(jnp.pad(a, ((0, rp - r), (0, width - c))))
        off += rp
    slab = jnp.concatenate(pieces, axis=0)         # (total_rows, 128)
    return {"slab": slab, "meta": tuple(meta), "head": head,
            "c_in_pad": _round_up(input_size, _SUBLANE),
            "num_classes": params["lin_w"].shape[0]}


# ------------------------------ pure-JAX reference ------------------------------

def ref_forward(x, params, K):
    def conv1d_causal(h, w, b, d):
        _, _, L = h.shape
        co = w.shape[0]
        out = jnp.zeros((h.shape[0], co, L), jnp.float32)
        for k in range(K):
            s = (K - 1 - k) * d
            hs = jnp.pad(h, ((0, 0), (0, 0), (s, 0)))[:, :, :L]
            out = out + jnp.einsum("oc,ncl->nol", w[:, :, k], hs)
        return out + b.reshape(1, co, 1)

    h = x
    for i, p in enumerate(params["blocks"]):
        d = 2 ** i
        h1 = jnp.maximum(conv1d_causal(h, p["w1"], p["b1"], d), 0.0)
        h2 = jnp.maximum(conv1d_causal(h1, p["w2"], p["b2"], d), 0.0)
        if "wd" in p:
            res = jnp.einsum("oc,ncl->nol", p["wd"], h) + p["bd"].reshape(1, -1, 1)
        else:
            res = h
        h = jnp.maximum(h2 + res, 0.0)
    logits = h[:, :, -1] @ params["lin_w"].T + params["lin_b"]
    return jax.nn.log_softmax(logits, axis=1)


# -------------------------------------- main --------------------------------------

if __name__ == "__main__":
    # cfg.model.input_size=4, cfg.model.channels=[8, 16], cfg.model.kernel_size=3,
    # cfg.model.dropout=0.2 (identity at inference), len(cfg.data.materials)=5.
    # Batch N=8 so the lane axis (N*L = 128) fills a full vreg (lane-occupancy item).
    N, C_IN, L = 8, 4, 16
    CHANNELS = (8, 16)
    KSIZE = 3
    N_MATERIALS = 5

    key = jax.random.PRNGKey(0)
    kx, kp = jax.random.split(key)
    x = jax.random.normal(kx, (N, C_IN, L), jnp.float32)
    params = init_params(kp, C_IN, CHANNELS, KSIZE, N_MATERIALS)
    kernel_params = prepare_kernel_params(params, C_IN, CHANNELS, KSIZE)

    out = jax.block_until_ready(tcn_forward(x, kernel_params, KSIZE))
    ref = jax.block_until_ready(ref_forward(x, params, KSIZE))

    assert out.shape == (N, N_MATERIALS), out.shape
    assert jnp.allclose(out, ref, rtol=1e-4, atol=1e-4), (out, ref)

    print("KERNEL_OK")
</pallas_src>

<mosaic_0001>
module attributes {stable_mosaic.version = 11 : i64} {
  func.func @kernel(%arg0: memref<8x4x16xf32, #tpu.memory_space<vmem>>, %arg1: memref<168x128xf32, #tpu.memory_space<vmem>>, %arg2: memref<8x5xf32, #tpu.memory_space<vmem>>, %arg3: memref<8x128xf32, #tpu.memory_space<vmem>>) attributes {dimension_semantics = [], scalar_prefetch = 0 : i64, scratch_operands = 1 : i64, tpu.core_type = #tpu.core_type<tc>} {
    %cst = arith.constant 0.000000e+00 : f32
    %0 = vector.broadcast %cst : f32 to vector<4x128xf32>
    %c4 = arith.constant 4 : index
    %c0 = arith.constant 0 : index
    %1 = vector.load %arg3[%c4, %c0] : memref<8x128xf32, #tpu.memory_space<vmem>>, vector<4x128xf32>
    tpu.vector_store %arg3[%c4, %c0], %0 {strides = array<i32>} : memref<8x128xf32, #tpu.memory_space<vmem>>, vector<4x128xf32>,
    %c0_0 = arith.constant 0 : index
    %c0_1 = arith.constant 0 : index
    %c0_2 = arith.constant 0 : index
    %2 = vector.load %arg0[%c0_0, %c0_1, %c0_2] : memref<8x4x16xf32, #tpu.memory_space<vmem>>, vector<1x4x16xf32>
    %3 = vector.shape_cast %2 : vector<1x4x16xf32> to vector<4x16xf32>
    %c0_3 = arith.constant 0 : index
    %c0_4 = arith.constant 0 : index
    %4 = vector.load %arg3[%c0_3, %c0_4] : memref<8x128xf32, #tpu.memory_space<vmem>>, vector<4x16xf32>
    tpu.vector_store %arg3[%c0_3, %c0_4], %3 {strides = array<i32>} : memref<8x128xf32, #tpu.memory_space<vmem>>, vector<4x16xf32>,
    %c1 = arith.constant 1 : index
    %c0_5 = arith.constant 0 : index
    %c0_6 = arith.constant 0 : index
    %5 = vector.load %arg0[%c1, %c0_5, %c0_6] : memref<8x4x16xf32, #tpu.memory_space<vmem>>, vector<1x4x16xf32>
    %6 = vector.shape_cast %5 : vector<1x4x16xf32> to vector<4x16xf32>
    %c0_7 = arith.constant 0 : index
    %c16 = arith.constant 16 : index
    %7 = vector.load %arg3[%c0_7, %c16] : memref<8x128xf32, #tpu.memory_space<vmem>>, vector<4x16xf32>
    tpu.vector_store %arg3[%c0_7, %c16], %6 {strides = array<i32>} : memref<8x128xf32, #tpu.memory_space<vmem>>, vector<4x16xf32>,
    %c2 = arith.constant 2 : index
    %c0_8 = arith.constant 0 : index
    %c0_9 = arith.constant 0 : index
    %8 = vector.load %arg0[%c2, %c0_8, %c0_9] : memref<8x4x16xf32, #tpu.memory_space<vmem>>, vector<1x4x16xf32>
    %9 = vector.shape_cast %8 : vector<1x4x16xf32> to vector<4x16xf32>
    %c0_10 = arith.constant 0 : index
    %c32 = arith.constant 32 : index
    %10 = vector.load %arg3[%c0_10, %c32] : memref<8x128xf32, #tpu.memory_space<vmem>>, vector<4x16xf32>
    tpu.vector_store %arg3[%c0_10, %c32], %9 {strides = array<i32>} : memref<8x128xf32, #tpu.memory_space<vmem>>, vector<4x16xf32>,
    %c3 = arith.constant 3 : index
    %c0_11 = arith.constant 0 : index
    %c0_12 = arith.constant 0 : index
    %11 = vector.load %arg0[%c3, %c0_11, %c0_12] : memref<8x4x16xf32, #tpu.memory_space<vmem>>, vector<1x4x16xf32>
    %12 = vector.shape_cast %11 : vector<1x4x16xf32> to vector<4x16xf32>
    %c0_13 = arith.constant 0 : index
    %c48 = arith.constant 48 : index
    %13 = vector.load %arg3[%c0_13, %c48] : memref<8x128xf32, #tpu.memory_space<vmem>>, vector<4x16xf32>
    tpu.vector_store %arg3[%c0_13, %c48], %12 {strides = array<i32>} : memref<8x128xf32, #tpu.memory_space<vmem>>, vector<4x16xf32>,
    %c4_14 = arith.constant 4 : index
    %c0_15 = arith.constant 0 : index
    %c0_16 = arith.constant 0 : index
    %14 = vector.load %arg0[%c4_14, %c0_15, %c0_16] : memref<8x4x16xf32, #tpu.memory_space<vmem>>, vector<1x4x16xf32>
    %15 = vector.shape_cast %14 : vector<1x4x16xf32> to vector<4x16xf32>
    %c0_17 = arith.constant 0 : index
    %c64 = arith.constant 64 : index
    %16 = vector.load %arg3[%c0_17, %c64] : memref<8x128xf32, #tpu.memory_space<vmem>>, vector<4x16xf32>
    tpu.vector_store %arg3[%c0_17, %c64], %15 {strides = array<i32>} : memref<8x128xf32, #tpu.memory_space<vmem>>, vector<4x16xf32>,
    %c5 = arith.constant 5 : index
    %c0_18 = arith.constant 0 : index
    %c0_19 = arith.constant 0 : index
    %17 = vector.load %arg0[%c5, %c0_18, %c0_19] : memref<8x4x16xf32, #tpu.memory_space<vmem>>, vector<1x4x16xf32>
    %18 = vector.shape_cast %17 : vector<1x4x16xf32> to vector<4x16xf32>
    %c0_20 = arith.constant 0 : index
    %c80 = arith.constant 80 : index
    %19 = vector.load %arg3[%c0_20, %c80] : memref<8x128xf32, #tpu.memory_space<vmem>>, vector<4x16xf32>
    tpu.vector_store %arg3[%c0_20, %c80], %18 {strides = array<i32>} : memref<8x128xf32, #tpu.memory_space<vmem>>, vector<4x16xf32>,
    %c6 = arith.constant 6 : index
    %c0_21 = arith.constant 0 : index
    %c0_22 = arith.constant 0 : index
    %20 = vector.load %arg0[%c6, %c0_21, %c0_22] : memref<8x4x16xf32, #tpu.memory_space<vmem>>, vector<1x4x16xf32>
    %21 = vector.shape_cast %20 : vector<1x4x16xf32> to vector<4x16xf32>
    %c0_23 = arith.constant 0 : index
    %c96 = arith.constant 96 : index
    %22 = vector.load %arg3[%c0_23, %c96] : memref<8x128xf32, #tpu.memory_space<vmem>>, vector<4x16xf32>
    tpu.vector_store %arg3[%c0_23, %c96], %21 {strides = array<i32>} : memref<8x128xf32, #tpu.memory_space<vmem>>, vector<4x16xf32>,
    %c7 = arith.constant 7 : index
    %c0_24 = arith.constant 0 : index
    %c0_25 = arith.constant 0 : index
    %23 = vector.load %arg0[%c7, %c0_24, %c0_25] : memref<8x4x16xf32, #tpu.memory_space<vmem>>, vector<1x4x16xf32>
    %24 = vector.shape_cast %23 : vector<1x4x16xf32> to vector<4x16xf32>
    %c0_26 = arith.constant 0 : index
    %c112 = arith.constant 112 : index
    %25 = vector.load %arg3[%c0_26, %c112] : memref<8x128xf32, #tpu.memory_space<vmem>>, vector<4x16xf32>
    tpu.vector_store %arg3[%c0_26, %c112], %24 {strides = array<i32>} : memref<8x128xf32, #tpu.memory_space<vmem>>, vector<4x16xf32>,
    %c0_27 = arith.constant 0 : index
    %c0_28 = arith.constant 0 : index
    %26 = vector.load %arg3[%c0_27, %c0_28] : memref<8x128xf32, #tpu.memory_space<vmem>>, vector<8x128xf32>
    %27 = tpu.iota {dimensions = array<i32: 1>} : vector<1x128xi32>
    %c16_i32 = arith.constant 16 : i32
    %c0_i32 = arith.constant 0 : i32
    %28 = arith.cmpi eq, %c16_i32, %c0_i32 : i32
    %c1_i32 = arith.constant 1 : i32
    %29 = arith.select %28, %c1_i32, %c16_i32 : i32
    %30 = vector.broadcast %29 : i32 to vector<1x128xi32>
    %31 = arith.remsi %27, %30 : vector<1x128xi32>
    %c0_i32_29 = arith.constant 0 : i32
    %32 = vector.broadcast %c0_i32_29 : i32 to vector<1x128xi32>
    %33 = arith.cmpi ne, %31, %32 : vector<1x128xi32>
    %c0_i32_30 = arith.constant 0 : i32
    %34 = vector.broadcast %c0_i32_30 : i32 to vector<1x128xi32>
    %35 = arith.cmpi slt, %31, %34 : vector<1x128xi32>
    %c0_i32_31 = arith.constant 0 : i32
    %36 = arith.cmpi slt, %29, %c0_i32_31 : i32
    %37 = vector.broadcast %36 : i1 to vector<1x128xi1>
    %38 = vector.broadcast %37 : vector<1x128xi1> to vector<1x128xi1>
    %39 = arith.xori %35, %38 : vector<1x128xi1>
    %40 = arith.andi %39, %33 : vector<1x128xi1>
    %41 = vector.broadcast %29 : i32 to vector<1x128xi32>
    %42 = arith.addi %31, %41 : vector<1x128xi32>
    %43 = arith.select %40, %42, %31 : vector<1x128xi1>, vector<1x128xi32>
    %c0_32 = arith.constant 0 : index
    %c0_33 = arith.constant 0 : index
    %44 = vector.load %arg1[%c0_32, %c0_33] : memref<168x128xf32, #tpu.memory_space<vmem>>, vector<16x24xf32>
    %c2_i32 = arith.constant 2 : i32
    %45 = tpu.dynamic_rotate %26 by %c2_i32 dim 1 : vector<8x128xf32>, i32 -> vector<8x128xf32>
    %c2_i32_34 = arith.constant 2 : i32
    %46 = vector.broadcast %c2_i32_34 : i32 to vector<1x128xi32>
    %47 = arith.cmpi sge, %43, %46 : vector<1x128xi32>
    %cst_35 = arith.constant 0.000000e+00 : f32
    %48 = vector.shape_cast %47 : vector<1x128xi1> to vector<1x128xi1>
    %49 = vector.broadcast %48 : vector<1x128xi1> to vector<8x128xi1>
    %50 = vector.broadcast %cst_35 : f32 to vector<8x128xf32>
    %51 = arith.select %49, %45, %50 : vector<8x128xi1>, vector<8x128xf32>
    %c1_i32_36 = arith.constant 1 : i32
    %52 = tpu.dynamic_rotate %26 by %c1_i32_36 dim 1 : vector<8x128xf32>, i32 -> vector<8x128xf32>
    %c1_i32_37 = arith.constant 1 : i32
    %53 = vector.broadcast %c1_i32_37 : i32 to vector<1x128xi32>
    %54 = arith.cmpi sge, %43, %53 : vector<1x128xi32>
    %cst_38 = arith.constant 0.000000e+00 : f32
    %55 = vector.shape_cast %54 : vector<1x128xi1> to vector<1x128xi1>
    %56 = vector.broadcast %55 : vector<1x128xi1> to vector<8x128xi1>
    %57 = vector.broadcast %cst_38 : f32 to vector<8x128xf32>
    %58 = arith.select %56, %52, %57 : vector<8x128xi1>, vector<8x128xf32>
    %59 = tpu.concatenate %51, %58, %26 in 0 : vector<8x128xf32>, vector<8x128xf32>, vector<8x128xf32> -> vector<24x128xf32>
    %cst_39 = arith.constant dense<0.000000e+00> : vector<16x128xf32>
    %60 = tpu.matmul %44, %59, %cst_39 {dimension_numbers = #tpu.dot_dimension_numbers<[1], [0], [0], [1], [0, 0, 1, 1], [], []>} : vector<16x24xf32>, vector<24x128xf32>, vector<16x128xf32> -> vector<16x128xf32>
    %c16_40 = arith.constant 16 : index
    %c0_41 = arith.constant 0 : index
    %61 = vector.load %arg1[%c16_40, %c0_41] : memref<168x128xf32, #tpu.memory_space<vmem>>, vector<16x1xf32>
    %62 = vector.broadcast %61 : vector<16x1xf32> to vector<16x128xf32>
    %63 = arith.addf %60, %62 : vector<16x128xf32>
    %64 = vector.extract_strided_slice %63 {offsets = [0, 0], sizes = [8, 128], strides = [1, 1]} : vector<16x128xf32> to vector<8x128xf32>
    %cst_42 = arith.constant 0.000000e+00 : f32
    %65 = vector.broadcast %cst_42 : f32 to vector<8x128xf32>
    %66 = arith.maximumf %64, %65 : vector<8x128xf32>
    %67 = vector.extract_strided_slice %63 {offsets = [8, 0], sizes = [8, 128], strides = [1, 1]} : vector<16x128xf32> to vector<8x128xf32>
    %c32_43 = arith.constant 32 : index
    %c0_44 = arith.constant 0 : index
    %68 = vector.load %arg1[%c32_43, %c0_44] : memref<168x128xf32, #tpu.memory_space<vmem>>, vector<8x24xf32>
    %c2_i32_45 = arith.constant 2 : i32
    %69 = tpu.dynamic_rotate %66 by %c2_i32_45 dim 1 : vector<8x128xf32>, i32 -> vector<8x128xf32>
    %c2_i32_46 = arith.constant 2 : i32
    %70 = vector.broadcast %c2_i32_46 : i32 to vector<1x128xi32>
    %71 = arith.cmpi sge, %43, %70 : vector<1x128xi32>
    %cst_47 = arith.constant 0.000000e+00 : f32
    %72 = vector.shape_cast %71 : vector<1x128xi1> to vector<1x128xi1>
    %73 = vector.broadcast %72 : vector<1x128xi1> to vector<8x128xi1>
    %74 = vector.broadcast %cst_47 : f32 to vector<8x128xf32>
    %75 = arith.select %73, %69, %74 : vector<8x128xi1>, vector<8x128xf32>
    %c1_i32_48 = arith.constant 1 : i32
    %76 = tpu.dynamic_rotate %66 by %c1_i32_48 dim 1 : vector<8x128xf32>, i32 -> vector<8x128xf32>
    %c1_i32_49 = arith.constant 1 : i32
    %77 = vector.broadcast %c1_i32_49 : i32 to vector<1x128xi32>
    %78 = arith.cmpi sge, %43, %77 : vector<1x128xi32>
    %cst_50 = arith.constant 0.000000e+00 : f32
    %79 = vector.shape_cast %78 : vector<1x128xi1> to vector<1x128xi1>
    %80 = vector.broadcast %79 : vector<1x128xi1> to vector<8x128xi1>
    %81 = vector.broadcast %cst_50 : f32 to vector<8x128xf32>
    %82 = arith.select %80, %76, %81 : vector<8x128xi1>, vector<8x128xf32>
    %83 = tpu.concatenate %75, %82, %66 in 0 : vector<8x128xf32>, vector<8x128xf32>, vector<8x128xf32> -> vector<24x128xf32>
    %cst_51 = arith.constant dense<0.000000e+00> : vector<8x128xf32>
    %84 = tpu.matmul %68, %83, %cst_51 {dimension_numbers = #tpu.dot_dimension_numbers<[1], [0], [0], [1], [0, 0, 1, 1], [], []>} : vector<8x24xf32>, vector<24x128xf32>, vector<8x128xf32> -> vector<8x128xf32>
    %c40 = arith.constant 40 : index
    %c0_52 = arith.constant 0 : index
    %85 = vector.load %arg1[%c40, %c0_52] : memref<168x128xf32, #tpu.memory_space<vmem>>, vector<8x1xf32>
    %86 = vector.broadcast %85 : vector<8x1xf32> to vector<8x128xf32>
    %87 = arith.addf %84, %86 : vector<8x128xf32>
    %cst_53 = arith.constant 0.000000e+00 : f32
    %88 = vector.broadcast %cst_53 : f32 to vector<8x128xf32>
    %89 = arith.maximumf %87, %88 : vector<8x128xf32>
    %90 = arith.addf %89, %67 : vector<8x128xf32>
    %cst_54 = arith.constant 0.000000e+00 : f32
    %91 = vector.broadcast %cst_54 : f32 to vector<8x128xf32>
    %92 = arith.maximumf %90, %91 : vector<8x128xf32>
    %c48_55 = arith.constant 48 : index
    %c0_56 = arith.constant 0 : index
    %93 = vector.load %arg1[%c48_55, %c0_56] : memref<168x128xf32, #tpu.memory_space<vmem>>, vector<32x24xf32>
    %c4_i32 = arith.constant 4 : i32
    %94 = tpu.dynamic_rotate %92 by %c4_i32 dim 1 : vector<8x128xf32>, i32 -> vector<8x128xf32>
    %c4_i32_57 = arith.constant 4 : i32
    %95 = vector.broadcast %c4_i32_57 : i32 to vector<1x128xi32>
    %96 = arith.cmpi sge, %43, %95 : vector<1x128xi32>
    %cst_58 = arith.constant 0.000000e+00 : f32
    %97 = vector.shape_cast %96 : vector<1x128xi1> to vector<1x128xi1>
    %98 = vector.broadcast %97 : vector<1x128xi1> to vector<8x128xi1>
    %99 = vector.broadcast %cst_58 : f32 to vector<8x128xf32>
    %100 = arith.select %98, %94, %99 : vector<8x128xi1>, vector<8x128xf32>
    %c2_i32_59 = arith.constant 2 : i32
    %101 = tpu.dynamic_rotate %92 by %c2_i32_59 dim 1 : vector<8x128xf32>, i32 -> vector<8x128xf32>
    %c2_i32_60 = arith.constant 2 : i32
    %102 = vector.broadcast %c2_i32_60 : i32 to vector<1x128xi32>
    %103 = arith.cmpi sge, %43, %102 : vector<1x128xi32>
    %cst_61 = arith.constant 0.000000e+00 : f32
    %104 = vector.shape_cast %103 : vector<1x128xi1> to vector<1x128xi1>
    %105 = vector.broadcast %104 : vector<1x128xi1> to vector<8x128xi1>
    %106 = vector.broadcast %cst_61 : f32 to vector<8x128xf32>
    %107 = arith.select %105, %101, %106 : vector<8x128xi1>, vector<8x128xf32>
    %108 = tpu.concatenate %100, %107, %92 in 0 : vector<8x128xf32>, vector<8x128xf32>, vector<8x128xf32> -> vector<24x128xf32>
    %cst_62 = arith.constant dense<0.000000e+00> : vector<32x128xf32>
    %109 = tpu.matmul %93, %108, %cst_62 {dimension_numbers = #tpu.dot_dimension_numbers<[1], [0], [0], [1], [0, 0, 1, 1], [], []>} : vector<32x24xf32>, vector<24x128xf32>, vector<32x128xf32> -> vector<32x128xf32>
    %c80_63 = arith.constant 80 : index
    %c0_64 = arith.constant 0 : index
    %110 = vector.load %arg1[%c80_63, %c0_64] : memref<168x128xf32, #tpu.memory_space<vmem>>, vector<32x1xf32>
    %111 = vector.broadcast %110 : vector<32x1xf32> to vector<32x128xf32>
    %112 = arith.addf %109, %111 : vector<32x128xf32>
    %113 = vector.extract_strided_slice %112 {offsets = [0, 0], sizes = [16, 128], strides = [1, 1]} : vector<32x128xf32> to vector<16x128xf32>
    %cst_65 = arith.constant 0.000000e+00 : f32
    %114 = vector.broadcast %cst_65 : f32 to vector<16x128xf32>
    %115 = arith.maximumf %113, %114 : vector<16x128xf32>
    %116 = vector.extract_strided_slice %112 {offsets = [16, 0], sizes = [16, 128], strides = [1, 1]} : vector<32x128xf32> to vector<16x128xf32>
    %c112_66 = arith.constant 112 : index
    %c0_67 = arith.constant 0 : index
    %117 = vector.load %arg1[%c112_66, %c0_67] : memref<168x128xf32, #tpu.memory_space<vmem>>, vector<16x48xf32>
    %c4_i32_68 = arith.constant 4 : i32
    %118 = tpu.dynamic_rotate %115 by %c4_i32_68 dim 1 : vector<16x128xf32>, i32 -> vector<16x128xf32>
    %c4_i32_69 = arith.constant 4 : i32
    %119 = vector.broadcast %c4_i32_69 : i32 to vector<1x128xi32>
    %120 = arith.cmpi sge, %43, %119 : vector<1x128xi32>
    %cst_70 = arith.constant 0.000000e+00 : f32
    %121 = vector.shape_cast %120 : vector<1x128xi1> to vector<1x128xi1>
    %122 = vector.broadcast %121 : vector<1x128xi1> to vector<16x128xi1>
    %123 = vector.broadcast %cst_70 : f32 to vector<16x128xf32>
    %124 = arith.select %122, %118, %123 : vector<16x128xi1>, vector<16x128xf32>
    %c2_i32_71 = arith.constant 2 : i32
    %125 = tpu.dynamic_rotate %115 by %c2_i32_71 dim 1 : vector<16x128xf32>, i32 -> vector<16x128xf32>
    %c2_i32_72 = arith.constant 2 : i32
    %126 = vector.broadcast %c2_i32_72 : i32 to vector<1x128xi32>
    %127 = arith.cmpi sge, %43, %126 : vector<1x128xi32>
    %cst_73 = arith.constant 0.000000e+00 : f32
    %128 = vector.shape_cast %127 : vector<1x128xi1> to vector<1x128xi1>
    %129 = vector.broadcast %128 : vector<1x128xi1> to vector<16x128xi1>
    %130 = vector.broadcast %cst_73 : f32 to vector<16x128xf32>
    %131 = arith.select %129, %125, %130 : vector<16x128xi1>, vector<16x128xf32>
    %132 = tpu.concatenate %124, %131, %115 in 0 : vector<16x128xf32>, vector<16x128xf32>, vector<16x128xf32> -> vector<48x128xf32>
    %cst_74 = arith.constant dense<0.000000e+00> : vector<16x128xf32>
    %133 = tpu.matmul %117, %132, %cst_74 {dimension_numbers = #tpu.dot_dimension_numbers<[1], [0], [0], [1], [0, 0, 1, 1], [], []>} : vector<16x48xf32>, vector<48x128xf32>, vector<16x128xf32> -> vector<16x128xf32>
    %c128 = arith.constant 128 : index
    %c0_75 = arith.constant 0 : index
    %134 = vector.load %arg1[%c128, %c0_75] : memref<168x128xf32, #tpu.memory_space<vmem>>, vector<16x1xf32>
    %135 = vector.broadcast %134 : vector<16x1xf32> to vector<16x128xf32>
    %136 = arith.addf %133, %135 : vector<16x128xf32>
    %cst_76 = arith.constant 0.000000e+00 : f32
    %137 = vector.broadcast %cst_76 : f32 to vector<16x128xf32>
    %138 = arith.maximumf %136, %137 : vector<16x128xf32>
    %139 = arith.addf %138, %116 : vector<16x128xf32>
    %cst_77 = arith.constant 0.000000e+00 : f32
    %140 = vector.broadcast %cst_77 : f32 to vector<16x128xf32>
    %141 = arith.maximumf %139, %140 : vector<16x128xf32>
    %142 = tpu.iota {dimensions = array<i32: 0>} : vector<8x128xi32>
    %143 = tpu.iota {dimensions = array<i32: 1>} : vector<8x128xi32>
    %c16_i32_78 = arith.constant 16 : i32
    %144 = vector.broadcast %c16_i32_78 : i32 to vector<8x128xi32>
    %145 = arith.muli %142, %144 : vector<8x128xi32>
    %c15_i32 = arith.constant 15 : i32
    %146 = vector.broadcast %c15_i32 : i32 to vector<8x128xi32>
    %147 = arith.addi %145, %146 : vector<8x128xi32>
    %148 = arith.cmpi eq, %143, %147 : vector<8x128xi32>
    %149 = arith.extui %148 : vector<8x128xi1> to vector<8x128xi32>
    %150 = arith.sitofp %149 : vector<8x128xi32> to vector<8x128xf32>
    %cst_79 = arith.constant dense<0.000000e+00> : vector<8x16xf32>
    %151 = tpu.matmul %150, %141, %cst_79 {dimension_numbers = #tpu.dot_dimension_numbers<[1], [1], [0], [0], [0, 0, 1, 0], [], []>} : vector<8x128xf32>, vector<16x128xf32>, vector<8x16xf32> -> vector<8x16xf32>
    %c144 = arith.constant 144 : index
    %c0_80 = arith.constant 0 : index
    %152 = vector.load %arg1[%c144, %c0_80] : memref<168x128xf32, #tpu.memory_space<vmem>>, vector<16x5xf32>
    %cst_81 = arith.constant dense<0.000000e+00> : vector<8x5xf32>
    %153 = tpu.matmul %151, %152, %cst_81 {dimension_numbers = #tpu.dot_dimension_numbers<[1], [0], [0], [1], [0, 0, 1, 1], [], []>} : vector<8x16xf32>, vector<16x5xf32>, vector<8x5xf32> -> vector<8x5xf32>
    %c160 = arith.constant 160 : index
    %c0_82 = arith.constant 0 : index
    %154 = vector.load %arg1[%c160, %c0_82] : memref<168x128xf32, #tpu.memory_space<vmem>>, vector<1x5xf32>
    %155 = vector.broadcast %154 : vector<1x5xf32> to vector<8x5xf32>
    %156 = arith.addf %153, %155 : vector<8x5xf32>
    %cst_83 = arith.constant dense<0xFF800000> : vector<8xf32>
    %157 = vector.multi_reduction <maximumf>, %156, %cst_83 [1] : vector<8x5xf32> to vector<8xf32>
    %158 = vector.shape_cast %157 : vector<8xf32> to vector<8x1xf32>
    %159 = vector.broadcast %158 : vector<8x1xf32> to vector<8x5xf32>
    %160 = arith.subf %156, %159 : vector<8x5xf32>
    %161 = math.exp %160 : vector<8x5xf32>
    %cst_84 = arith.constant dense<0.000000e+00> : vector<8xf32>
    %162 = vector.multi_reduction <add>, %161, %cst_84 [1] : vector<8x5xf32> to vector<8xf32>
    %163 = vector.shape_cast %162 : vector<8xf32> to vector<8x1xf32>
    %164 = math.log %163 : vector<8x1xf32>
    %165 = vector.broadcast %164 : vector<8x1xf32> to vector<8x5xf32>
    %166 = arith.subf %160, %165 : vector<8x5xf32>
    %c0_85 = arith.constant 0 : index
    %c0_86 = arith.constant 0 : index
    %167 = vector.load %arg2[%c0_85, %c0_86] : memref<8x5xf32, #tpu.memory_space<vmem>>, vector<8x5xf32>
    tpu.vector_store %arg2[%c0_85, %c0_86], %166 {strides = array<i32>} : memref<8x5xf32, #tpu.memory_space<vmem>>, vector<8x5xf32>,
    return
  }
}

</mosaic_0001>

<llo_original>
// kernel: tpu_custom_call.1
$region0: #{tpu_custom_call.1}
  #allocation0 [shape = 'u32[]', space=smem, size = 0x4, offset = 0x4, fixed_abs, tag = 'smem constant byte address 0x4 - core index']
  #allocation1 [shape = 'u32[144,128]{1,0:T(1,128)}', space=vmem, size = 0x12000, scoped, tag = 'internal scratch']
  #allocation2 [shape = 'f32[8,128]{1,0:T(8,128)}', space=vmem, size = 0x1000, scoped, tag = 'scratch operand']
  %s0 = inlined_call_operand.hbm [shape: f32[8,4,16], index: 0, kind: input, shape index: {}]
  %s1 = inlined_call_operand.hbm [shape: f32[168,128], index: 1, kind: input, shape index: {}]
  %s2 = inlined_call_operand.hbm [shape: f32[8,5], index: 2, kind: output, shape index: {}]
  %s3 = sld [smem:[#allocation0]]
  $region26: #{tpu_custom_call.1} parent=0
    _
  %s5 = ssub.s32 1, %s3
  %s6 = scalar_select 0, %s5, %s3
  $region1: #{tpu_custom_call.1} parent=0
    #allocation3 [shape = 'u8[16384]{0}', space=vmem, size = 0x4000, scoped, tag = 'input window, operand 0, single buffered']
    #allocation4 [shape = 's32[1]{0}', space=sflag, size = 0x4, scoped, tag = 'scoped memory for tpu_custom_call.1']
    #allocation5 [shape = 's32[1]{0}', space=sflag, size = 0x4, scoped, tag = 'scoped memory for tpu_custom_call.1']
    #allocation6 [shape = 'u8[86016]{0}', space=vmem, size = 0x15000, scoped, tag = 'input window, operand 1, single buffered']
    #allocation7 [shape = 's32[1]{0}', space=sflag, size = 0x4, scoped, tag = 'scoped memory for tpu_custom_call.1']
    #allocation8 [shape = 'u8[4096]{0}', space=vmem, size = 0x1000, scoped, tag = 'output window, operand 0, single buffered']
    %7 = vsyncpa [#allocation4], 0
    %8 = vsyncpa [#allocation7], 0
    %9 = vsyncpa [#allocation5], 0
    // Predicated region
    $region2: #{tpu_custom_call.1} parent=1 // pred_check
      _
    $region3: #{tpu_custom_call.1} parent=1 // pred_check_branch
      %11 = sbr.rel (0) target = $region5
    $region4: #{tpu_custom_call.1} parent=1 // pred_region
      %s13 = ssub.s32 512, 512
      %14 = vsyncadd [#allocation4], %s13
      %s15 = sshll.u32 [#allocation3], 4
      %s16 = int_to_ptr.vmem [resolvable:$true] %s15
      %21 = dma.hbm_to_vmem [thread:$0]  %s0, 512, %s16, [#allocation4], 64, 64, 4
    $region5: #{tpu_custom_call.1} parent=1 // pred_fallthru
      _
    // Predicated region
    $region6: #{tpu_custom_call.1} parent=1 // pred_check
      _
    $region7: #{tpu_custom_call.1} parent=1 // pred_check_branch
      %23 = sbr.rel (0) target = $region9
    $region8: #{tpu_custom_call.1} parent=1 // pred_region
      %s25 = ssub.s32 2688, 2688
      %26 = vsyncadd [#allocation7], %s25
      %s27 = sshll.u32 [#allocation6], 4
      %s28 = int_to_ptr.vmem [resolvable:$true] %s27
      %33 = dma.hbm_to_vmem [thread:$0]  %s1, 2688, %s28, [#allocation7], 128, 128, 8
    $region9: #{tpu_custom_call.1} parent=1 // pred_fallthru
      _
    // Predicated region
    $region10: #{tpu_custom_call.1} parent=1 // pred_check
      _
    $region11: #{tpu_custom_call.1} parent=1 // pred_check_branch
      %35 = sbr.rel (0) target = $region13
    $region12: #{tpu_custom_call.1} parent=1 // pred_region
      %36 = dma.done [#allocation4], 512
    $region13: #{tpu_custom_call.1} parent=1 // pred_fallthru
      _
    // Predicated region
    $region14: #{tpu_custom_call.1} parent=1 // pred_check
      _
    $region15: #{tpu_custom_call.1} parent=1 // pred_check_branch
      %38 = sbr.rel (0) target = $region17
    $region16: #{tpu_custom_call.1} parent=1 // pred_region
      %39 = dma.done [#allocation7], 2688
    $region17: #{tpu_custom_call.1} parent=1 // pred_fallthru
      _
    %40 = vst [vmem:[#allocation2 + $0x4] sm:$0xf] 0.0
    %v41 = vld [vmem:[#allocation3] sm:$0xf]
    %vm42 = vcmask 125952
    %43 = vst.msk [vmem:[#allocation2] sm:$0xf] %vm42, %v41
    %s44 = scalar_lea.vmem [#allocation3], 4
    %v45 = vld [vmem:[%s44] sm:$0xf]
    %47 = vrot.lane.b32.xlu0 %v45, 16
    %v48 = vpop.permute.xlu0 %47
    %vm50 = vcmask 257152
    %51 = vst.msk [vmem:[#allocation2] sm:$0xf] %vm50, %v48
    %s52 = scalar_lea.vmem [#allocation3], 8
    %v53 = vld [vmem:[%s52] sm:$0xf]
    %55 = vrot.lane.b32.xlu0 %v53, 32
    %v56 = vpop.permute.xlu0 %55
    %vm58 = vcmask 388352
    %59 = vst.msk [vmem:[#allocation2] sm:$0xf] %vm58, %v56
    %s60 = scalar_lea.vmem [#allocation3], 12
    %v61 = vld [vmem:[%s60] sm:$0xf]
    %63 = vrot.lane.b32.xlu0 %v61, 48
    %v64 = vpop.permute.xlu0 %63
    %vm66 = vcmask 519552
    %67 = vst.msk [vmem:[#allocation2] sm:$0xf] %vm66, %v64
    %s68 = scalar_lea.vmem [#allocation3], 16
    %v69 = vld [vmem:[%s68] sm:$0xf]
    %71 = vrot.lane.b32.xlu0 %v69, 64
    %v72 = vpop.permute.xlu0 %71
    %vm74 = vcmask 650752
    %75 = vst.msk [vmem:[#allocation2] sm:$0xf] %vm74, %v72
    %s76 = scalar_lea.vmem [#allocation3], 20
    %v77 = vld [vmem:[%s76] sm:$0xf]
    %79 = vrot.lane.b32.xlu0 %v77, 80
    %v80 = vpop.permute.xlu0 %79
    %vm82 = vcmask 781952
    %83 = vst.msk [vmem:[#allocation2] sm:$0xf] %vm82, %v80
    %s84 = scalar_lea.vmem [#allocation3], 24
    %v85 = vld [vmem:[%s84] sm:$0xf]
    %87 = vrot.lane.b32.xlu0 %v85, 96
    %v88 = vpop.permute.xlu0 %87
    %vm90 = vcmask 913152
    %91 = vst.msk [vmem:[#allocation2] sm:$0xf] %vm90, %v88
    %s92 = scalar_lea.vmem [#allocation3], 28
    %v93 = vld [vmem:[%s92] sm:$0xf]
    %95 = vrot.lane.b32.xlu0 %v93, 112
    %v96 = vpop.permute.xlu0 %95
    %vm98 = vcmask 1044352
    %99 = vst.msk [vmem:[#allocation2] sm:$0xf] %vm98, %v96
    %v100 = vld [vmem:[#allocation2] sm:$0xff]
    %v101 = vlaneseq
    %v102 = vand.u32 %v101, 127
    %vm103 = vcmp.lt.s32.totalorder %v102, 0
    %v104 = vsub.s32 0, %v102
    %v105 = vsel %vm103, %v104, %v102
    %v106 = vshrl.u32 %v105, 4
    %v107 = vand.u32 %v105, 15
    %v108 = vsub.s32 0, %v107
    %v109 = vsel %vm103, %v108, %v107
    %vm110 = vcmp.ne.s32.totalorder %v109, 0
    %vm111 = vcmp.lt.s32.totalorder %v109, 0
    %vm112 = vmand %vm111, %vm110
    %v113 = vadd.s32 %v109, 16
    %v114 = vsel %vm112, %v113, %v109
    %v115 = vld [vmem:[#allocation6] sm:$0xff]
    %v116 = vld [vmem:[#allocation6 + $0x8] sm:$0xff]
    %117 = vrot.lane.b32.xlu0 %v100, 2
    %v118 = vpop.permute.xlu0 %117
    %vm119 = vcmp.ge.s32.totalorder %v114, 2
    %v120 = vsel %vm119, 1, 0
    %vm121 = vcmp.eq.s32.totalorder %v120, 1
    %v122 = vsel %vm121, %v118, 0.0
    %123 = vrot.lane.b32.xlu0 %v100, 1
    %v124 = vpop.permute.xlu0 %123
    %vm125 = vcmp.ge.s32.totalorder %v114, 1
    %v126 = vsel %vm125, 1, 0
    %vm127 = vcmp.eq.s32.totalorder %v126, 1
    %v128 = vsel %vm127, %v124, 0.0
    %v129 = vld [vmem:[#allocation6 + $0x10] sm:$0xff]
    %v130 = vld [vmem:[#allocation6 + $0x18] sm:$0xff]
    %132 = vset.pattern.permute.xlu0 0
    %133 = vperm.xlu0 %132, %v129
    %v134 = vpop.permute.xlu0 %133
    %137 = vset.pattern.permute.xlu0 0
    %138 = vperm.xlu0 %137, %v130
    %v139 = vpop.permute.xlu0 %138
    %vm141 = vcmask 195584
    %v143 = vsel %vm141, %v115, 0
    %v146 = vsel %vm141, %v116, 0
    %148 = vmatprep.subr.mxu0 0.0
    %149 = vmatpush1.msra.mxu0 %v122
    %150 = vmatprep.subr.mxu0 0.0
    %151 = vmatpush1.msra.mxu0 %v128
    %152 = vmatprep.subr.mxu0 0.0
    %153 = vmatpush1.msra.mxu0 %v100
    %154 = vmatprep.subr.mxu0 0.0
    %155 = vmatpush1.msra.mxu0 0.0
    %156 = vmatprep.subr.mxu0 0.0
    %157 = vmatpush1.msra.mxu0 0.0
    %158 = vmatprep.subr.mxu0 0.0
    %159 = vmatpush1.msra.mxu0 0.0
    %160 = vmatprep.subr.mxu0 0.0
    %161 = vmatpush1.msra.mxu0 0.0
    %162 = vmatprep.subr.mxu0 0.0
    %163 = vmatpush1.msra.mxu0 0.0
    %164 = vmatprep.subr.mxu0 0.0
    %165 = vmatpush1.msra.mxu0 0.0
    %166 = vmatprep.subr.mxu0 0.0
    %167 = vmatpush1.msra.mxu0 0.0
    %168 = vmatprep.subr.mxu0 0.0
    %169 = vmatpush1.msra.mxu0 0.0
    %170 = vmatprep.subr.mxu0 0.0
    %171 = vmatpush1.msra.mxu0 0.0
    %172 = vmatprep.subr.mxu0 0.0
    %173 = vmatpush1.msra.mxu0 0.0
    %174 = vmatprep.subr.mxu0 0.0
    %175 = vmatpush1.msra.mxu0 0.0
    %176 = vmatprep.subr.mxu0 0.0
    %177 = vmatpush1.msra.mxu0 0.0
    %178 = vmatprep.subr.mxu0 0.0
    %179 = vmatpush1.msra.mxu0 0.0
    %180 = vmatprep.subr.mxu0 0.0
    %181 = vmatpush1.msra.mxu0 0.0
    %182 = vmatprep.subr.mxu0 0.0
    %183 = vmatpush1.msra.mxu0 0.0
    %184 = vmatprep.subr.mxu0 0.0
    %185 = vmatpush1.msra.mxu0 0.0
    %186 = vmatprep.subr.mxu0 0.0
    %187 = vmatpush1.msra.mxu0 0.0
    %188 = vmatprep.subr.mxu0 0.0
    %189 = vmatpush1.msra.mxu0 0.0
    %190 = vmatprep.subr.mxu0 0.0
    %191 = vmatpush1.msra.mxu0 0.0
    %192 = vmatprep.subr.mxu0 0.0
    %193 = vmatpush1.msra.mxu0 0.0
    %194 = vmatprep.subr.mxu0 0.0
    %195 = vmatpush1.msra.mxu0 0.0
    %196 = vmatprep.subr.mxu0 0.0
    %197 = vmatpush1.msra.mxu0 0.0
    %198 = vmatprep.subr.mxu0 0.0
    %199 = vmatpush1.msra.mxu0 0.0
    %200 = vmatprep.subr.mxu0 0.0
    %201 = vmatpush1.msra.mxu0 0.0
    %202 = vmatprep.subr.mxu0 0.0
    %203 = vmatpush1.msra.mxu0 0.0
    %204 = vmatprep.subr.mxu0 0.0
    %205 = vmatpush1.msra.mxu0 0.0
    %206 = vmatprep.subr.mxu0 0.0
    %207 = vmatpush1.msra.mxu0 0.0
    %208 = vmatprep.subr.mxu0 0.0
    %209 = vmatpush1.msra.mxu0 0.0
    %210 = vmatprep.subr.mxu0 0.0
    %211 = vmatpush1.msra.mxu0 0.0
    %212 = vmatprep.mubr.f32.mxu0 0.0
    %213 = vmatmul.mubr.f32.gmra.mrb[0].mxu0 %v143
    %v214 = vpop.f32.mrb[0].mxu0
    %v215 = vadd.f32 %v134, %v214
    %v216 = vpop.f32.mrb[0].mxu0
    %217 = vmatprep.mubr.f32.mxu0 0.0
    %218 = vmatmul.mubr.f32.gmra.mrb[0].mxu0 %v146
    %v219 = vpop.f32.mrb[0].mxu0
    %v220 = vadd.f32 %v139, %v219
    %v221 = vpop.f32.mrb[0].mxu0
    %222 = vdwg.mxu0
    %v223 = vmax.f32 %v215, 0.0
    %v224 = vld [vmem:[#allocation6 + $0x20] sm:$0xff]
    %225 = vrot.lane.b32.xlu0 %v223, 2
    %v226 = vpop.permute.xlu0 %225
    %v227 = vsel %vm121, %v226, 0.0
    %228 = vrot.lane.b32.xlu0 %v223, 1
    %v229 = vpop.permute.xlu0 %228
    %v230 = vsel %vm127, %v229, 0.0
    %v231 = vld [vmem:[#allocation6 + $0x28] sm:$0xff]
    %233 = vset.pattern.permute.xlu0 0
    %234 = vperm.xlu0 %233, %v231
    %v235 = vpop.permute.xlu0 %234
    %v238 = vsel %vm141, %v224, 0
    %240 = vmatprep.subr.mxu0 0.0
    %241 = vmatpush1.msra.mxu0 %v227
    %242 = vmatprep.subr.mxu0 0.0
    %243 = vmatpush1.msra.mxu0 %v230
    %244 = vmatprep.subr.mxu0 0.0
    %245 = vmatpush1.msra.mxu0 %v223
    %246 = vmatprep.subr.mxu0 0.0
    %247 = vmatpush1.msra.mxu0 0.0
    %248 = vmatprep.subr.mxu0 0.0
    %249 = vmatpush1.msra.mxu0 0.0
    %250 = vmatprep.subr.mxu0 0.0
    %251 = vmatpush1.msra.mxu0 0.0
    %252 = vmatprep.subr.mxu0 0.0
    %253 = vmatpush1.msra.mxu0 0.0
    %254 = vmatprep.subr.mxu0 0.0
    %255 = vmatpush1.msra.mxu0 0.0
    %256 = vmatprep.subr.mxu0 0.0
    %257 = vmatpush1.msra.mxu0 0.0
    %258 = vmatprep.subr.mxu0 0.0
    %259 = vmatpush1.msra.mxu0 0.0
    %260 = vmatprep.subr.mxu0 0.0
    %261 = vmatpush1.msra.mxu0 0.0
    %262 = vmatprep.subr.mxu0 0.0
    %263 = vmatpush1.msra.mxu0 0.0
    %264 = vmatprep.subr.mxu0 0.0
    %265 = vmatpush1.msra.mxu0 0.0
    %266 = vmatprep.subr.mxu0 0.0
    %267 = vmatpush1.msra.mxu0 0.0
    %268 = vmatprep.subr.mxu0 0.0
    %269 = vmatpush1.msra.mxu0 0.0
    %270 = vmatprep.subr.mxu0 0.0
    %271 = vmatpush1.msra.mxu0 0.0
    %272 = vmatprep.subr.mxu0 0.0
    %273 = vmatpush1.msra.mxu0 0.0
    %274 = vmatprep.subr.mxu0 0.0
    %275 = vmatpush1.msra.mxu0 0.0
    %276 = vmatprep.subr.mxu0 0.0
    %277 = vmatpush1.msra.mxu0 0.0
    %278 = vmatprep.subr.mxu0 0.0
    %279 = vmatpush1.msra.mxu0 0.0
    %280 = vmatprep.subr.mxu0 0.0
    %281 = vmatpush1.msra.mxu0 0.0
    %282 = vmatprep.subr.mxu0 0.0
    %283 = vmatpush1.msra.mxu0 0.0
    %284 = vmatprep.subr.mxu0 0.0
    %285 = vmatpush1.msra.mxu0 0.0
    %286 = vmatprep.subr.mxu0 0.0
    %287 = vmatpush1.msra.mxu0 0.0
    %288 = vmatprep.subr.mxu0 0.0
    %289 = vmatpush1.msra.mxu0 0.0
    %290 = vmatprep.subr.mxu0 0.0
    %291 = vmatpush1.msra.mxu0 0.0
    %292 = vmatprep.subr.mxu0 0.0
    %293 = vmatpush1.msra.mxu0 0.0
    %294 = vmatprep.subr.mxu0 0.0
    %295 = vmatpush1.msra.mxu0 0.0
    %296 = vmatprep.subr.mxu0 0.0
    %297 = vmatpush1.msra.mxu0 0.0
    %298 = vmatprep.subr.mxu0 0.0
    %299 = vmatpush1.msra.mxu0 0.0
    %300 = vmatprep.subr.mxu0 0.0
    %301 = vmatpush1.msra.mxu0 0.0
    %302 = vmatprep.subr.mxu0 0.0
    %303 = vmatpush1.msra.mxu0 0.0
    %304 = vmatprep.mubr.f32.mxu0 0.0
    %305 = vmatmul.mubr.f32.gmra.mrb[0].mxu0 %v238
    %v306 = vpop.f32.mrb[0].mxu0
    %v307 = vadd.f32 %v235, %v306
    %v308 = vpop.f32.mrb[0].mxu0
    %309 = vdwg.mxu0
    %v310 = vmax.f32 %v307, 0.0
    %v311 = vadd.f32 %v310, %v220
    %v312 = vmax.f32 %v311, 0.0
    %v313 = vld [vmem:[#allocation6 + $0x30] sm:$0xff]
    %v314 = vld [vmem:[#allocation6 + $0x38] sm:$0xff]
    %v315 = vld [vmem:[#allocation6 + $0x40] sm:$0xff]
    %v316 = vld [vmem:[#allocation6 + $0x48] sm:$0xff]
    %317 = vrot.lane.b32.xlu0 %v312, 4
    %v318 = vpop.permute.xlu0 %317
    %vm319 = vcmp.ge.s32.totalorder %v114, 4
    %v320 = vsel %vm319, 1, 0
    %vm321 = vcmp.eq.s32.totalorder %v320, 1
    %v322 = vsel %vm321, %v318, 0.0
    %323 = vrot.lane.b32.xlu0 %v312, 2
    %v324 = vpop.permute.xlu0 %323
    %v325 = vsel %vm121, %v324, 0.0
    %v326 = vld [vmem:[#allocation6 + $0x50] sm:$0xff]
    %v327 = vld [vmem:[#allocation6 + $0x58] sm:$0xff]
    %v328 = vld [vmem:[#allocation6 + $0x60] sm:$0xff]
    %v329 = vld [vmem:[#allocation6 + $0x68] sm:$0xff]
    %331 = vset.pattern.permute.xlu0 0
    %332 = vperm.xlu0 %331, %v326
    %v333 = vpop.permute.xlu0 %332
    %336 = vset.pattern.permute.xlu0 0
    %337 = vperm.xlu0 %336, %v327
    %v338 = vpop.permute.xlu0 %337
    %341 = vset.pattern.permute.xlu0 0
    %342 = vperm.xlu0 %341, %v328
    %v343 = vpop.permute.xlu0 %342
    %346 = vset.pattern.permute.xlu0 0
    %347 = vperm.xlu0 %346, %v329
    %v348 = vpop.permute.xlu0 %347
    %v351 = vsel %vm141, %v313, 0
    %v354 = vsel %vm141, %v314, 0
    %v357 = vsel %vm141, %v315, 0
    %v360 = vsel %vm141, %v316, 0
    %362 = vmatprep.subr.mxu0 0.0
    %363 = vmatpush1.msra.mxu0 %v322
    %364 = vmatprep.subr.mxu0 0.0
    %365 = vmatpush1.msra.mxu0 %v325
    %366 = vmatprep.subr.mxu0 0.0
    %367 = vmatpush1.msra.mxu0 %v312
    %368 = vmatprep.subr.mxu0 0.0
    %369 = vmatpush1.msra.mxu0 0.0
    %370 = vmatprep.subr.mxu0 0.0
    %371 = vmatpush1.msra.mxu0 0.0
    %372 = vmatprep.subr.mxu0 0.0
    %373 = vmatpush1.msra.mxu0 0.0
    %374 = vmatprep.subr.mxu0 0.0
    %375 = vmatpush1.msra.mxu0 0.0
    %376 = vmatprep.subr.mxu0 0.0
    %377 = vmatpush1.msra.mxu0 0.0
    %378 = vmatprep.subr.mxu0 0.0
    %379 = vmatpush1.msra.mxu0 0.0
    %380 = vmatprep.subr.mxu0 0.0
    %381 = vmatpush1.msra.mxu0 0.0
    %382 = vmatprep.subr.mxu0 0.0
    %383 = vmatpush1.msra.mxu0 0.0
    %384 = vmatprep.subr.mxu0 0.0
    %385 = vmatpush1.msra.mxu0 0.0
    %386 = vmatprep.subr.mxu0 0.0
    %387 = vmatpush1.msra.mxu0 0.0
    %388 = vmatprep.subr.mxu0 0.0
    %389 = vmatpush1.msra.mxu0 0.0
    %390 = vmatprep.subr.mxu0 0.0
    %391 = vmatpush1.msra.mxu0 0.0
    %392 = vmatprep.subr.mxu0 0.0
    %393 = vmatpush1.msra.mxu0 0.0
    %394 = vmatprep.subr.mxu0 0.0
    %395 = vmatpush1.msra.mxu0 0.0
    %396 = vmatprep.subr.mxu0 0.0
    %397 = vmatpush1.msra.mxu0 0.0
    %398 = vmatprep.subr.mxu0 0.0
    %399 = vmatpush1.msra.mxu0 0.0
    %400 = vmatprep.subr.mxu0 0.0
    %401 = vmatpush1.msra.mxu0 0.0
    %402 = vmatprep.subr.mxu0 0.0
    %403 = vmatpush1.msra.mxu0 0.0
    %404 = vmatprep.subr.mxu0 0.0
    %405 = vmatpush1.msra.mxu0 0.0
    %406 = vmatprep.subr.mxu0 0.0
    %407 = vmatpush1.msra.mxu0 0.0
    %408 = vmatprep.subr.mxu0 0.0
    %409 = vmatpush1.msra.mxu0 0.0
    %410 = vmatprep.subr.mxu0 0.0
    %411 = vmatpush1.msra.mxu0 0.0
    %412 = vmatprep.subr.mxu0 0.0
    %413 = vmatpush1.msra.mxu0 0.0
    %414 = vmatprep.subr.mxu0 0.0
    %415 = vmatpush1.msra.mxu0 0.0
    %416 = vmatprep.subr.mxu0 0.0
    %417 = vmatpush1.msra.mxu0 0.0
    %418 = vmatprep.subr.mxu0 0.0
    %419 = vmatpush1.msra.mxu0 0.0
    %420 = vmatprep.subr.mxu0 0.0
    %421 = vmatpush1.msra.mxu0 0.0
    %422 = vmatprep.subr.mxu0 0.0
    %423 = vmatpush1.msra.mxu0 0.0
    %424 = vmatprep.subr.mxu0 0.0
    %425 = vmatpush1.msra.mxu0 0.0
    %426 = vmatprep.mubr.f32.mxu0 0.0
    %427 = vmatmul.mubr.f32.gmra.mrb[0].mxu0 %v351
    %v428 = vpop.f32.mrb[0].mxu0
    %v429 = vadd.f32 %v333, %v428
    %v430 = vpop.f32.mrb[0].mxu0
    %431 = vmatprep.mubr.f32.mxu0 0.0
    %432 = vmatmul.mubr.f32.gmra.mrb[0].mxu0 %v354
    %v433 = vpop.f32.mrb[0].mxu0
    %v434 = vadd.f32 %v338, %v433
    %v435 = vpop.f32.mrb[0].mxu0
    %436 = vmatprep.mubr.f32.mxu0 0.0
    %437 = vmatmul.mubr.f32.gmra.mrb[0].mxu0 %v357
    %v438 = vpop.f32.mrb[0].mxu0
    %v439 = vadd.f32 %v343, %v438
    %v440 = vpop.f32.mrb[0].mxu0
    %441 = vmatprep.mubr.f32.mxu0 0.0
    %442 = vmatmul.mubr.f32.gmra.mrb[0].mxu0 %v360
    %v443 = vpop.f32.mrb[0].mxu0
    %v444 = vadd.f32 %v348, %v443
    %v445 = vpop.f32.mrb[0].mxu0
    %446 = vdwg.mxu0
    %v447 = vmax.f32 %v429, 0.0
    %v448 = vmax.f32 %v434, 0.0
    %v449 = vld [vmem:[#allocation6 + $0x70] sm:$0xff]
    %v450 = vld [vmem:[#allocation6 + $0x78] sm:$0xff]
    %451 = vrot.lane.b32.xlu0 %v447, 4
    %v452 = vpop.permute.xlu0 %451
    %453 = vrot.lane.b32.xlu0 %v448, 4
    %v454 = vpop.permute.xlu0 %453
    %v455 = vsel %vm321, %v452, 0.0
    %v456 = vsel %vm321, %v454, 0.0
    %457 = vrot.lane.b32.xlu0 %v447, 2
    %v458 = vpop.permute.xlu0 %457
    %459 = vrot.lane.b32.xlu0 %v448, 2
    %v460 = vpop.permute.xlu0 %459
    %v461 = vsel %vm121, %v458, 0.0
    %v462 = vsel %vm121, %v460, 0.0
    %v463 = vld [vmem:[#allocation6 + $0x80] sm:$0xff]
    %v464 = vld [vmem:[#allocation6 + $0x88] sm:$0xff]
    %466 = vset.pattern.permute.xlu0 0
    %467 = vperm.xlu0 %466, %v463
    %v468 = vpop.permute.xlu0 %467
    %471 = vset.pattern.permute.xlu0 0
    %472 = vperm.xlu0 %471, %v464
    %v473 = vpop.permute.xlu0 %472
    %vm475 = vcmask 392192
    %v477 = vsel %vm475, %v449, 0
    %v480 = vsel %vm475, %v450, 0
    %482 = vmatprep.subr.mxu0 0.0
    %483 = vmatpush1.msra.mxu0 %v455
    %484 = vmatprep.subr.mxu0 0.0
    %485 = vmatpush1.msra.mxu0 %v456
    %486 = vmatprep.subr.mxu0 0.0
    %487 = vmatpush1.msra.mxu0 %v461
    %488 = vmatprep.subr.mxu0 0.0
    %489 = vmatpush1.msra.mxu0 %v462
    %490 = vmatprep.subr.mxu0 0.0
    %491 = vmatpush1.msra.mxu0 %v447
    %492 = vmatprep.subr.mxu0 0.0
    %493 = vmatpush1.msra.mxu0 %v448
    %494 = vmatprep.subr.mxu0 0.0
    %495 = vmatpush1.msra.mxu0 0.0
    %496 = vmatprep.subr.mxu0 0.0
    %497 = vmatpush1.msra.mxu0 0.0
    %498 = vmatprep.subr.mxu0 0.0
    %499 = vmatpush1.msra.mxu0 0.0
    %500 = vmatprep.subr.mxu0 0.0
    %501 = vmatpush1.msra.mxu0 0.0
    %502 = vmatprep.subr.mxu0 0.0
    %503 = vmatpush1.msra.mxu0 0.0
    %504 = vmatprep.subr.mxu0 0.0
    %505 = vmatpush1.msra.mxu0 0.0
    %506 = vmatprep.subr.mxu0 0.0
    %507 = vmatpush1.msra.mxu0 0.0
    %508 = vmatprep.subr.mxu0 0.0
    %509 = vmatpush1.msra.mxu0 0.0
    %510 = vmatprep.subr.mxu0 0.0
    %511 = vmatpush1.msra.mxu0 0.0
    %512 = vmatprep.subr.mxu0 0.0
    %513 = vmatpush1.msra.mxu0 0.0
    %514 = vmatprep.subr.mxu0 0.0
    %515 = vmatpush1.msra.mxu0 0.0
    %516 = vmatprep.subr.mxu0 0.0
    %517 = vmatpush1.msra.mxu0 0.0
    %518 = vmatprep.subr.mxu0 0.0
    %519 = vmatpush1.msra.mxu0 0.0
    %520 = vmatprep.subr.mxu0 0.0
    %521 = vmatpush1.msra.mxu0 0.0
    %522 = vmatprep.subr.mxu0 0.0
    %523 = vmatpush1.msra.mxu0 0.0
    %524 = vmatprep.subr.mxu0 0.0
    %525 = vmatpush1.msra.mxu0 0.0
    %526 = vmatprep.subr.mxu0 0.0
    %527 = vmatpush1.msra.mxu0 0.0
    %528 = vmatprep.subr.mxu0 0.0
    %529 = vmatpush1.msra.mxu0 0.0
    %530 = vmatprep.subr.mxu0 0.0
    %531 = vmatpush1.msra.mxu0 0.0
    %532 = vmatprep.subr.mxu0 0.0
    %533 = vmatpush1.msra.mxu0 0.0
    %534 = vmatprep.subr.mxu0 0.0
    %535 = vmatpush1.msra.mxu0 0.0
    %536 = vmatprep.subr.mxu0 0.0
    %537 = vmatpush1.msra.mxu0 0.0
    %538 = vmatprep.subr.mxu0 0.0
    %539 = vmatpush1.msra.mxu0 0.0
    %540 = vmatprep.subr.mxu0 0.0
    %541 = vmatpush1.msra.mxu0 0.0
    %542 = vmatprep.subr.mxu0 0.0
    %543 = vmatpush1.msra.mxu0 0.0
    %544 = vmatprep.subr.mxu0 0.0
    %545 = vmatpush1.msra.mxu0 0.0
    %546 = vmatprep.mubr.f32.mxu0 0.0
    %547 = vmatmul.mubr.f32.gmra.mrb[0].mxu0 %v477
    %v548 = vpop.f32.mrb[0].mxu0
    %v549 = vadd.f32 %v468, %v548
    %v550 = vpop.f32.mrb[0].mxu0
    %551 = vmatprep.mubr.f32.mxu0 0.0
    %552 = vmatmul.mubr.f32.gmra.mrb[0].mxu0 %v480
    %v553 = vpop.f32.mrb[0].mxu0
    %v554 = vadd.f32 %v473, %v553
    %v555 = vpop.f32.mrb[0].mxu0
    %556 = vdwg.mxu0
    %v557 = vmax.f32 %v549, 0.0
    %v558 = vmax.f32 %v554, 0.0
    %v559 = vadd.f32 %v557, %v439
    %v560 = vadd.f32 %v558, %v444
    %v561 = vmax.f32 %v559, 0.0
    %v562 = vmax.f32 %v560, 0.0
    %v563 = vlaneseq
    %v564 = vshrl.u32 %v563, 7
    %v565 = vmul.u32 %v564, 16
    %v566 = vadd.s32 %v565, 15
    %vm567 = vcmp.eq.s32.totalorder %v102, %v566
    %v568 = vsel %vm567, 1, 0
    %v569 = vcvt.s32.f32 %v568
    %570 = vmatprep.subr.mxu0 0.0
    %571 = vmatpush1.xpose.msra.mxu0 %v561
    %572 = vmatprep.subr.mxu0 0.0
    %573 = vmatpush1.xpose.msra.mxu0 %v562
    %574 = vmatprep.subr.mxu0 0.0
    %575 = vmatpush1.xpose.msra.mxu0 0.0
    %576 = vmatprep.subr.mxu0 0.0
    %577 = vmatpush1.xpose.msra.mxu0 0.0
    %578 = vmatprep.subr.mxu0 0.0
    %579 = vmatpush1.xpose.msra.mxu0 0.0
    %580 = vmatprep.subr.mxu0 0.0
    %581 = vmatpush1.xpose.msra.mxu0 0.0
    %582 = vmatprep.subr.mxu0 0.0
    %583 = vmatpush1.xpose.msra.mxu0 0.0
    %584 = vmatprep.subr.mxu0 0.0
    %585 = vmatpush1.xpose.msra.mxu0 0.0
    %586 = vmatprep.subr.mxu0 0.0
    %587 = vmatpush1.xpose.msra.mxu0 0.0
    %588 = vmatprep.subr.mxu0 0.0
    %589 = vmatpush1.xpose.msra.mxu0 0.0
    %590 = vmatprep.subr.mxu0 0.0
    %591 = vmatpush1.xpose.msra.mxu0 0.0
    %592 = vmatprep.subr.mxu0 0.0
    %593 = vmatpush1.xpose.msra.mxu0 0.0
    %594 = vmatprep.subr.mxu0 0.0
    %595 = vmatpush1.xpose.msra.mxu0 0.0
    %596 = vmatprep.subr.mxu0 0.0
    %597 = vmatpush1.xpose.msra.mxu0 0.0
    %598 = vmatprep.subr.mxu0 0.0
    %599 = vmatpush1.xpose.msra.mxu0 0.0
    %600 = vmatprep.subr.mxu0 0.0
    %601 = vmatpush1.xpose.msra.mxu0 0.0
    %602 = vmatprep.subr.mxu0 0.0
    %603 = vmatpush1.xpose.msra.mxu0 0.0
    %604 = vmatprep.subr.mxu0 0.0
    %605 = vmatpush1.xpose.msra.mxu0 0.0
    %606 = vmatprep.subr.mxu0 0.0
    %607 = vmatpush1.xpose.msra.mxu0 0.0
    %608 = vmatprep.subr.mxu0 0.0
    %609 = vmatpush1.xpose.msra.mxu0 0.0
    %610 = vmatprep.subr.mxu0 0.0
    %611 = vmatpush1.xpose.msra.mxu0 0.0
    %612 = vmatprep.subr.mxu0 0.0
    %613 = vmatpush1.xpose.msra.mxu0 0.0
    %614 = vmatprep.subr.mxu0 0.0
    %615 = vmatpush1.xpose.msra.mxu0 0.0
    %616 = vmatprep.subr.mxu0 0.0
    %617 = vmatpush1.xpose.msra.mxu0 0.0
    %618 = vmatprep.subr.mxu0 0.0
    %619 = vmatpush1.xpose.msra.mxu0 0.0
    %620 = vmatprep.subr.mxu0 0.0
    %621 = vmatpush1.xpose.msra.mxu0 0.0
    %622 = vmatprep.subr.mxu0 0.0
    %623 = vmatpush1.xpose.msra.mxu0 0.0
    %624 = vmatprep.subr.mxu0 0.0
    %625 = vmatpush1.xpose.msra.mxu0 0.0
    %626 = vmatprep.subr.mxu0 0.0
    %627 = vmatpush1.xpose.msra.mxu0 0.0
    %628 = vmatprep.subr.mxu0 0.0
    %629 = vmatpush1.xpose.msra.mxu0 0.0
    %630 = vmatprep.subr.mxu0 0.0
    %631 = vmatpush1.xpose.msra.mxu0 0.0
    %632 = vmatprep.subr.mxu0 0.0
    %633 = vmatpush1.xpose.msra.mxu0 0.0
    %634 = vmatprep.mubr.f32.mxu0 0.0
    %635 = vmatmul.mubr.f32.gmra.mrb[0].mxu0 %v569
    %v636 = vpop.f32.mrb[0].mxu0
    %v637 = vadd.f32 0.0, %v636
    %v638 = vpop.f32.mrb[0].mxu0
    %639 = vdwg.mxu0
    %v640 = vld [vmem:[#allocation6 + $0x90] sm:$0xff]
    %v641 = vld [vmem:[#allocation6 + $0x98] sm:$0xff]
    %v642 = vld [vmem:[#allocation6 + $0xa0] sm:$0x1]
    %v643 = vlaneseq
    %v644 = vshrl.u32 %v643, 7
    %v645 = vsub.s32 0, %v644
    %v646 = vrot.slane %v642, %v645
    %vm647 = vcmask 130048
    %v649 = vsel %vm647, %v637, 0
    %651 = vmatprep.subr.mxu0 0.0
    %652 = vmatpush1.msra.mxu0 %v640
    %653 = vmatprep.subr.mxu0 0.0
    %654 = vmatpush1.msra.mxu0 %v641
    %655 = vmatprep.subr.mxu0 0.0
    %656 = vmatpush1.msra.mxu0 0.0
    %657 = vmatprep.subr.mxu0 0.0
    %658 = vmatpush1.msra.mxu0 0.0
    %659 = vmatprep.subr.mxu0 0.0
    %660 = vmatpush1.msra.mxu0 0.0
    %661 = vmatprep.subr.mxu0 0.0
    %662 = vmatpush1.msra.mxu0 0.0
    %663 = vmatprep.subr.mxu0 0.0
    %664 = vmatpush1.msra.mxu0 0.0
    %665 = vmatprep.subr.mxu0 0.0
    %666 = vmatpush1.msra.mxu0 0.0
    %667 = vmatprep.subr.mxu0 0.0
    %668 = vmatpush1.msra.mxu0 0.0
    %669 = vmatprep.subr.mxu0 0.0
    %670 = vmatpush1.msra.mxu0 0.0
    %671 = vmatprep.subr.mxu0 0.0
    %672 = vmatpush1.msra.mxu0 0.0
    %673 = vmatprep.subr.mxu0 0.0
    %674 = vmatpush1.msra.mxu0 0.0
    %675 = vmatprep.subr.mxu0 0.0
    %676 = vmatpush1.msra.mxu0 0.0
    %677 = vmatprep.subr.mxu0 0.0
    %678 = vmatpush1.msra.mxu0 0.0
    %679 = vmatprep.subr.mxu0 0.0
    %680 = vmatpush1.msra.mxu0 0.0
    %681 = vmatprep.subr.mxu0 0.0
    %682 = vmatpush1.msra.mxu0 0.0
    %683 = vmatprep.subr.mxu0 0.0
    %684 = vmatpush1.msra.mxu0 0.0
    %685 = vmatprep.subr.mxu0 0.0
    %686 = vmatpush1.msra.mxu0 0.0
    %687 = vmatprep.subr.mxu0 0.0
    %688 = vmatpush1.msra.mxu0 0.0
    %689 = vmatprep.subr.mxu0 0.0
    %690 = vmatpush1.msra.mxu0 0.0
    %691 = vmatprep.subr.mxu0 0.0
    %692 = vmatpush1.msra.mxu0 0.0
    %693 = vmatprep.subr.mxu0 0.0
    %694 = vmatpush1.msra.mxu0 0.0
    %695 = vmatprep.subr.mxu0 0.0
    %696 = vmatpush1.msra.mxu0 0.0
    %697 = vmatprep.subr.mxu0 0.0
    %698 = vmatpush1.msra.mxu0 0.0
    %699 = vmatprep.subr.mxu0 0.0
    %700 = vmatpush1.msra.mxu0 0.0
    %701 = vmatprep.subr.mxu0 0.0
    %702 = vmatpush1.msra.mxu0 0.0
    %703 = vmatprep.subr.mxu0 0.0
    %704 = vmatpush1.msra.mxu0 0.0
    %705 = vmatprep.subr.mxu0 0.0
    %706 = vmatpush1.msra.mxu0 0.0
    %707 = vmatprep.subr.mxu0 0.0
    %708 = vmatpush1.msra.mxu0 0.0
    %709 = vmatprep.subr.mxu0 0.0
    %710 = vmatpush1.msra.mxu0 0.0
    %711 = vmatprep.subr.mxu0 0.0
    %712 = vmatpush1.msra.mxu0 0.0
    %713 = vmatprep.subr.mxu0 0.0
    %714 = vmatpush1.msra.mxu0 0.0
    %715 = vmatprep.mubr.f32.mxu0 0.0
    %716 = vmatmul.mubr.f32.gmra.mrb[0].mxu0 %v649
    %v717 = vpop.f32.mrb[0].mxu0
    %v718 = vadd.f32 %v646, %v717
    %v719 = vpop.f32.mrb[0].mxu0
    %720 = vdwg.mxu0
    %vm721 = vcmask 39936
    %v722 = vsel %vm721, %v718, -inf
    %723 = vmax.xlane.f32.xlu0 %v722
    %v724 = vpop.xlane.xlu0 %723
    %v725 = vsub.f32 %v718, %v724
    %v726 = vmul.f32 %v725, 1.442695
    %v727 = vpow.pop %v726
    %v728 = vsel %vm721, %v727, 0.0
    %729 = vadd.xlane.f32.xlu0 %v728
    %v730 = vpop.xlane.xlu0 %729
    %v731 = vlog2.pop %v730
    %v732 = vmul.f32 %v731, 0.6931472
    %v733 = vsub.f32 %v725, %v732
    %734 = vst.msk [vmem:[#allocation8] sm:$0xff] %vm721, %v733
    // Predicated region
    $region18: #{tpu_custom_call.1} parent=1 // pred_check
      _
    $region19: #{tpu_custom_call.1} parent=1 // pred_check_branch
      %736 = sbr.rel (0) target = $region21
    $region20: #{tpu_custom_call.1} parent=1 // pred_region
      %s738 = ssub.s32 128, 128
      %739 = vsyncadd [#allocation5], %s738
      %s741 = sshll.u32 [#allocation8], 4
      %s742 = int_to_ptr.vmem [resolvable:$true] %s741
      %744 = dma.vmem_to_hbm [thread:$0]  %s742, 128, %s2, [#allocation5]
    $region21: #{tpu_custom_call.1} parent=1 // pred_fallthru
      _
    // Predicated region
    $region22: #{tpu_custom_call.1} parent=1 // pred_check
      _
    $region23: #{tpu_custom_call.1} parent=1 // pred_check_branch
      %746 = sbr.rel (0) target = $region25
    $region24: #{tpu_custom_call.1} parent=1 // pred_region
      %747 = dma.done [#allocation5], 128
    $region25: #{tpu_custom_call.1} parent=1 // pred_fallthru
      _
    %748 = vsyncpa [#allocation4], 1
    %749 = vsyncpa [#allocation7], 1
    %750 = vsyncpa [#allocation5], 1

</llo_original>
